<compile_context>
chip_gen: v7x
topology: tpu7x:2x2x1
jax: 0.10.0
libtpu: 0.0.40
codegen_flags: <defaults>
</compile_context>

<pallas_src>
import functools
import math

import jax
import jax.numpy as jnp
from jax.experimental import pallas as pl
from jax.experimental.pallas import tpu as pltpu


# --------------------------------------------------------------------------- #
# Clustering preamble (plain JAX glue).
# TODO(synk): cluster_dpc_knn is not defined in the provided module; this is the
# standard TCFormer DPC-KNN with a deterministic tie-break instead of torch's
# random density noise.  Kept in XLA (top_k / argmin are a poor fit for a
# Pallas kernel).
# --------------------------------------------------------------------------- #
def cluster_dpc_knn(x, cluster_num, k):
    B, N, C = x.shape
    x2 = jnp.sum(x * x, axis=-1)                                          # (B,N)
    d2 = x2[:, :, None] + x2[:, None, :] - 2.0 * jnp.einsum("bnc,bmc->bnm", x, x)
    dist_matrix = jnp.sqrt(jnp.maximum(d2, 0.0)) / (C ** 0.5)             # (B,N,N)
    neg_nearest, _ = jax.lax.top_k(-dist_matrix, k)                       # k smallest
    density = jnp.exp(-jnp.mean(neg_nearest ** 2, axis=-1))               # (B,N)
    density = density + jnp.arange(N, dtype=density.dtype)[None, :] * 1e-6
    mask = (density[:, None, :] > density[:, :, None]).astype(x.dtype)
    dist_max = jnp.max(dist_matrix.reshape(B, -1), axis=-1)[:, None, None]
    dist = jnp.min(dist_matrix * mask + dist_max * (1.0 - mask), axis=-1)
    score = dist * density
    _, index_down = jax.lax.top_k(score, cluster_num)                     # (B,M)
    dist_to_centers = jnp.take_along_axis(dist_matrix, index_down[:, :, None], axis=1)
    idx_cluster = jnp.argmin(dist_to_centers, axis=1).astype(jnp.int32)   # (B,N)
    idx_cluster = idx_cluster.at[jnp.arange(B)[:, None], index_down].set(
        jnp.arange(cluster_num, dtype=jnp.int32)[None, :])
    return idx_cluster, cluster_num


def _default_vmem_limit_bytes():
    """Generation-aware scoped-VMEM cap (review: 128 MiB parts vs 64 MiB v7x)."""
    try:
        kind = jax.devices()[0].device_kind.lower()
    except Exception:  # pragma: no cover
        kind = ""
    if "v7" in kind:
        return 56 * 1024 * 1024
    if any(t in kind for t in ("v4", "v5", "v6")):
        return 100 * 1024 * 1024
    return 48 * 1024 * 1024


# --------------------------------------------------------------------------- #
# Kernel 1: fused QKV projection.  One (TM, C) x (C, 3C) GEMM per grid step,
# bf16 operands, f32 MXU accumulation; q/k/v written as three packed (B, N, C)
# bf16 arrays (the exact layout the attention kernel consumes, no XLA transpose
# in between).  The softmax scale is folded into q's store path (free, f32).
# --------------------------------------------------------------------------- #
def _qkv_proj_kernel(x_ref, w_ref, q_ref, k_ref, v_ref, *, dim, q_scale):
    qkv = jnp.dot(x_ref[0], w_ref[...], preferred_element_type=jnp.float32)  # (TM,3C)
    q_ref[0] = (qkv[:, :dim] * q_scale).astype(q_ref.dtype)
    k_ref[0] = qkv[:, dim:2 * dim].astype(k_ref.dtype)
    v_ref[0] = qkv[:, 2 * dim:].astype(v_ref.dtype)


# --------------------------------------------------------------------------- #
# Kernel 2: cluster-masked attention + fused output projection.
# Grid = (batch, query_tile), both parallel.  K/V/Wp/bias blocks are resident
# (K/V re-fetched only when the batch changes).  Heads are a static in-kernel
# unroll; per-head contexts are re-packed on the lane axis and projected with a
# single full-C-deep GEMM; the (TQ, C) f32 output store is lane-dense.
# --------------------------------------------------------------------------- #
def _ct_attn_kernel(idxq_ref, idxk_ref, q_ref, k_ref, v_ref, wp_ref, bp_ref,
                    o_ref, *, eps, n_tokens, num_head, head_dim):
    # Same-cluster predicate: built once per (batch, query tile) from two tiny
    # int32 vectors, reused by every head.
    same = idxq_ref[0] == idxk_ref[0]              # (TQ,1) == (1,N) -> (TQ,N)

    neg_large = jnp.float32(-1e9)
    eps_f = jnp.float32(eps)
    eps_over_n = jnp.float32(eps / n_tokens)

    ctx_heads = []
    for h in range(num_head):                      # static unroll (H is small)
        sl = slice(h * head_dim, (h + 1) * head_dim)
        qh = q_ref[0, :, sl]                       # (TQ, hd) bf16 (pre-scaled)
        kh = k_ref[0, :, sl]                       # (N,  hd) bf16
        vh = v_ref[0, :, sl]                       # (N,  hd) bf16

        # scale * q_h @ k_h^T on the MXU (bf16 in, f32 accumulate).
        s = jax.lax.dot_general(qh, kh, (((1,), (1,)), ((), ())),
                                preferred_element_type=jnp.float32)   # (TQ, N)
        # Cross-cluster entries -> -1e9 (the reference's masked_fill(attn==0,
        # -1e9); using the cluster predicate avoids false-masking exact zeros).
        s = jnp.where(same, s, neg_large)

        # Exact, overflow-safe rewrite of
        #   attn = (exp(s) + eps/N) / (sum exp(s) + eps),  ctx = attn @ v
        # with m = max(row_max, 0):
        #   ctx = [e @ v + (eps/N) e^-m colsum(v)] * recip,
        #   recip = 1 / (sum(e) + eps e^-m),   e = exp(s - m)
        m = jnp.maximum(jnp.max(s, axis=-1, keepdims=True), 0.0)      # (TQ, 1)
        e = jnp.exp(s - m)                                            # (TQ, N)
        em = jnp.exp(-m)                                              # (TQ, 1)
        recip = pl.reciprocal(jnp.sum(e, axis=-1, keepdims=True) + eps_f * em,
                              approx=True)                            # (TQ, 1)

        pv = jnp.dot(e.astype(jnp.bfloat16), vh,
                     preferred_element_type=jnp.float32)              # (TQ, hd)
        v_colsum = jnp.sum(vh.astype(jnp.float32), axis=0, keepdims=True)  # (1, hd)
        ctx = pv * recip + (eps_over_n * em * recip) * v_colsum       # (TQ, hd)
        ctx_heads.append(ctx.astype(jnp.bfloat16))

    # Heads re-packed on the lane axis -> one full-C contraction for the output
    # projection (MXU-friendly) + lane-dense (TQ, C) f32 store.
    ctx_all = jnp.concatenate(ctx_heads, axis=-1)                     # (TQ, C)
    out = jnp.dot(ctx_all, wp_ref[...], preferred_element_type=jnp.float32)
    o_ref[0] = out + bp_ref[...]


# --------------------------------------------------------------------------- #
# Wrapper.  Linear weights are passed pre-transposed (C, C) so y = x @ W^T,
# matching torch.nn.Linear; bp is the proj bias (C,).
# --------------------------------------------------------------------------- #
def ct_attention2(x, idx_cluster, wq_t, wk_t, wv_t, wp_t, bp, *,
                  num_head, eps=1e-6, block_q=None, block_m=None):
    B, N, C = x.shape
    assert C % num_head == 0
    H = num_head
    hd = C // H
    scale = hd ** (-0.5)

    # Defaults target the 256-wide v6e/v7x MXU and large HBM-streaming tiles.
    # On v7x, K+V resident per batch is 4*N*C bytes (x2 double-buffered); if a
    # production N*C pushes that past ~50 MiB, lower TQ / block heads instead.
    TQ = block_q if block_q is not None else min(256, N)
    TM = block_m if block_m is not None else min(512, N)
    assert N % TQ == 0 and N % TM == 0, "N must be divisible by the row tiles"

    vmem_limit = _default_vmem_limit_bytes()

    # ---- kernel 1: fused QKV projection ----------------------------------- #
    xb = x.astype(jnp.bfloat16)
    wqkv = jnp.concatenate([wq_t, wk_t, wv_t], axis=1).astype(jnp.bfloat16)  # (C,3C)

    qkv_kernel = functools.partial(_qkv_proj_kernel, dim=C, q_scale=scale)
    q, k, v = pl.pallas_call(
        qkv_kernel,
        out_shape=(jax.ShapeDtypeStruct((B, N, C), jnp.bfloat16),
                   jax.ShapeDtypeStruct((B, N, C), jnp.bfloat16),
                   jax.ShapeDtypeStruct((B, N, C), jnp.bfloat16)),
        grid=(B, N // TM),
        in_specs=[
            pl.BlockSpec((1, TM, C), lambda b, m: (b, m, 0)),
            pl.BlockSpec((C, 3 * C), lambda b, m: (0, 0)),     # resident weights
        ],
        out_specs=(
            pl.BlockSpec((1, TM, C), lambda b, m: (b, m, 0)),
            pl.BlockSpec((1, TM, C), lambda b, m: (b, m, 0)),
            pl.BlockSpec((1, TM, C), lambda b, m: (b, m, 0)),
        ),
        compiler_params=pltpu.CompilerParams(
            dimension_semantics=("parallel", "parallel"),
            vmem_limit_bytes=vmem_limit),
        cost_estimate=pl.CostEstimate(
            flops=2 * B * N * C * 3 * C,
            transcendentals=0,
            bytes_accessed=B * N * C * 2 + C * 3 * C * 2 + 3 * B * N * C * 2),
    )(xb, wqkv)

    # ---- kernel 2: cluster-masked attention + output projection ----------- #
    idx = idx_cluster.astype(jnp.int32)
    idx_q = idx[:, :, None]            # (B, N, 1) query-side cluster ids
    idx_k = idx[:, None, :]            # (B, 1, N) key-side cluster ids

    wp_b = wp_t.astype(jnp.bfloat16)                 # (C, C): y = ctx @ Wp^T
    bp2 = bp.astype(jnp.float32).reshape(1, C)

    attn_kernel = functools.partial(_ct_attn_kernel, eps=eps, n_tokens=N,
                                    num_head=H, head_dim=hd)
    return pl.pallas_call(
        attn_kernel,
        out_shape=jax.ShapeDtypeStruct((B, N, C), jnp.float32),
        grid=(B, N // TQ),             # fully parallel (v7x megacore friendly)
        in_specs=[
            pl.BlockSpec((1, TQ, 1), lambda b, qi: (b, qi, 0)),   # idx_q tile
            pl.BlockSpec((1, 1, N), lambda b, qi: (b, 0, 0)),     # idx_k (per batch)
            pl.BlockSpec((1, TQ, C), lambda b, qi: (b, qi, 0)),   # q tile
            pl.BlockSpec((1, N, C), lambda b, qi: (b, 0, 0)),     # K resident per batch
            pl.BlockSpec((1, N, C), lambda b, qi: (b, 0, 0)),     # V resident per batch
            pl.BlockSpec((C, C), lambda b, qi: (0, 0)),           # Wp^T resident
            pl.BlockSpec((1, C), lambda b, qi: (0, 0)),           # proj bias resident
        ],
        out_specs=pl.BlockSpec((1, TQ, C), lambda b, qi: (b, qi, 0)),
        compiler_params=pltpu.CompilerParams(
            dimension_semantics=("parallel", "parallel"),
            vmem_limit_bytes=vmem_limit),
        cost_estimate=pl.CostEstimate(
            flops=4 * B * N * N * C + 2 * B * N * C * C,
            transcendentals=B * H * N * N,
            bytes_accessed=(B * N * C * 2            # q (bf16)
                            + 2 * B * N * C * 2      # K, V (fetched once per batch)
                            + B * N * C * 4          # output (f32)
                            + 2 * B * N * 4          # cluster ids
                            + C * C * 2 + C * 4)),   # Wp + bias
    )(idx_q, idx_k, q, k, v, wp_b, bp2)


if __name__ == "__main__":
    # Small deterministic configuration consistent with the module.
    B, N, C = 2, 32, 32
    num_head = 4
    sample_ratio = 0.25
    knn_k = 5
    eps = 1e-6

    key = jax.random.PRNGKey(0)
    kx, kq, kk, kv, kp, kb = jax.random.split(key, 6)

    x = jax.random.normal(kx, (B, N, C), dtype=jnp.float32)

    # nn.Linear weights stored pre-transposed (C, C) so y = x @ W^T; proj bias (C,).
    w_scale = 1.0 / math.sqrt(C)
    wq_t = jax.random.normal(kq, (C, C), dtype=jnp.float32) * w_scale
    wk_t = jax.random.normal(kk, (C, C), dtype=jnp.float32) * w_scale
    wv_t = jax.random.normal(kv, (C, C), dtype=jnp.float32) * w_scale
    wp_t = jax.random.normal(kp, (C, C), dtype=jnp.float32) * w_scale
    bp = jax.random.normal(kb, (C,), dtype=jnp.float32) * 0.01

    cluster_num = max(math.ceil(N * sample_ratio), 1)
    idx_cluster, cluster_num = cluster_dpc_knn(x, cluster_num, knn_k)

    # block_q/block_m chosen small so the toy run exercises multiple query and
    # row tiles; production defaults are min(256, N) / min(512, N).
    out = ct_attention2(x, idx_cluster, wq_t, wk_t, wv_t, wp_t, bp,
                        num_head=num_head, eps=eps, block_q=16, block_m=16)
    jax.block_until_ready(out)
    assert out.shape == (B, N, C) and out.dtype == jnp.float32
    assert bool(jnp.all(jnp.isfinite(out)))

    # Pure-JAX f32 reference (same cluster-predicate mask the kernel uses).
    hd = C // num_head
    qr = (x @ wq_t).reshape(B, N, num_head, hd).transpose(0, 2, 1, 3)
    kr = (x @ wk_t).reshape(B, N, num_head, hd).transpose(0, 2, 1, 3)
    vr = (x @ wv_t).reshape(B, N, num_head, hd).transpose(0, 2, 1, 3)
    s = jnp.einsum("bhnd,bhmd->bhnm", qr, kr) * (hd ** -0.5)
    same = idx_cluster[:, None, :, None] == idx_cluster[:, None, None, :]
    s = jnp.where(same, s, -1e9)
    a = jnp.exp(s)
    a = (a + eps / N) / (jnp.sum(a, axis=-1, keepdims=True) + eps)
    ref = jnp.einsum("bhnm,bhmd->bhnd", a, vr).transpose(0, 2, 1, 3).reshape(B, N, C)
    ref = ref @ wp_t + bp

    rel_err = jnp.linalg.norm(out - ref) / jnp.linalg.norm(ref)
    assert float(rel_err) < 0.05, f"relative error too large: {float(rel_err)}"
    print("KERNEL_OK")
</pallas_src>

<mosaic_0001>
module attributes {stable_mosaic.version = 11 : i64} {
  func.func @_qkv_proj_kernel(%arg0: i32, %arg1: i32, %arg2: memref<1x16x32xbf16, #tpu.memory_space<vmem>>, %arg3: memref<32x96xbf16, #tpu.memory_space<vmem>>, %arg4: memref<1x16x32xbf16, #tpu.memory_space<vmem>>, %arg5: memref<1x16x32xbf16, #tpu.memory_space<vmem>>, %arg6: memref<1x16x32xbf16, #tpu.memory_space<vmem>>) attributes {dimension_semantics = [#tpu.dimension_semantics<parallel>, #tpu.dimension_semantics<parallel>], iteration_bounds = array<i64: 2, 2>, scalar_prefetch = 0 : i64, scratch_operands = 0 : i64, tpu.core_type = #tpu.core_type<tc>, window_params = [{transform_indices = @transform_0, window_bounds = array<i64: 1, 16, 32>}, {pipeline_mode = #tpu.pipeline_mode<synchronous>, transform_indices = @transform_1, window_bounds = array<i64: 32, 96>}, {transform_indices = @transform_2, window_bounds = array<i64: 1, 16, 32>}, {transform_indices = @transform_3, window_bounds = array<i64: 1, 16, 32>}, {transform_indices = @transform_4, window_bounds = array<i64: 1, 16, 32>}]} {
    %c0 = arith.constant 0 : index
    %c0_0 = arith.constant 0 : index
    %c0_1 = arith.constant 0 : index
    %0 = vector.load %arg2[%c0, %c0_0, %c0_1] : memref<1x16x32xbf16, #tpu.memory_space<vmem>>, vector<1x16x32xbf16>
    %1 = vector.shape_cast %0 : vector<1x16x32xbf16> to vector<16x32xbf16>
    %c0_2 = arith.constant 0 : index
    %c0_3 = arith.constant 0 : index
    %2 = vector.load %arg3[%c0_2, %c0_3] : memref<32x96xbf16, #tpu.memory_space<vmem>>, vector<32x96xbf16>
    %cst = arith.constant dense<0.000000e+00> : vector<16x96xf32>
    %3 = tpu.matmul %1, %2, %cst {dimension_numbers = #tpu.dot_dimension_numbers<[1], [0], [0], [1], [0, 0, 1, 1], [], []>} : vector<16x32xbf16>, vector<32x96xbf16>, vector<16x96xf32> -> vector<16x96xf32>
    %4 = vector.extract_strided_slice %3 {offsets = [0, 0], sizes = [16, 32], strides = [1, 1]} : vector<16x96xf32> to vector<16x32xf32>
    %cst_4 = arith.constant 0.353553385 : f32
    %5 = vector.broadcast %cst_4 : f32 to vector<16x32xf32>
    %6 = arith.mulf %4, %5 : vector<16x32xf32>
    %7 = arith.truncf %6 : vector<16x32xf32> to vector<16x32xbf16>
    %c0_5 = arith.constant 0 : index
    %c0_6 = arith.constant 0 : index
    %c0_7 = arith.constant 0 : index
    %8 = vector.load %arg4[%c0_5, %c0_6, %c0_7] : memref<1x16x32xbf16, #tpu.memory_space<vmem>>, vector<1x16x32xbf16>
    %9 = vector.shape_cast %8 : vector<1x16x32xbf16> to vector<16x32xbf16>
    %10 = vector.shape_cast %7 : vector<16x32xbf16> to vector<1x16x32xbf16>
    tpu.vector_store %arg4[%c0_5, %c0_6, %c0_7], %10 {strides = array<i32>} : memref<1x16x32xbf16, #tpu.memory_space<vmem>>, vector<1x16x32xbf16>,
    %11 = vector.extract_strided_slice %3 {offsets = [0, 32], sizes = [16, 32], strides = [1, 1]} : vector<16x96xf32> to vector<16x32xf32>
    %12 = arith.truncf %11 : vector<16x32xf32> to vector<16x32xbf16>
    %c0_8 = arith.constant 0 : index
    %c0_9 = arith.constant 0 : index
    %c0_10 = arith.constant 0 : index
    %13 = vector.load %arg5[%c0_8, %c0_9, %c0_10] : memref<1x16x32xbf16, #tpu.memory_space<vmem>>, vector<1x16x32xbf16>
    %14 = vector.shape_cast %13 : vector<1x16x32xbf16> to vector<16x32xbf16>
    %15 = vector.shape_cast %12 : vector<16x32xbf16> to vector<1x16x32xbf16>
    tpu.vector_store %arg5[%c0_8, %c0_9, %c0_10], %15 {strides = array<i32>} : memref<1x16x32xbf16, #tpu.memory_space<vmem>>, vector<1x16x32xbf16>,
    %16 = vector.extract_strided_slice %3 {offsets = [0, 64], sizes = [16, 32], strides = [1, 1]} : vector<16x96xf32> to vector<16x32xf32>
    %17 = arith.truncf %16 : vector<16x32xf32> to vector<16x32xbf16>
    %c0_11 = arith.constant 0 : index
    %c0_12 = arith.constant 0 : index
    %c0_13 = arith.constant 0 : index
    %18 = vector.load %arg6[%c0_11, %c0_12, %c0_13] : memref<1x16x32xbf16, #tpu.memory_space<vmem>>, vector<1x16x32xbf16>
    %19 = vector.shape_cast %18 : vector<1x16x32xbf16> to vector<16x32xbf16>
    %20 = vector.shape_cast %17 : vector<16x32xbf16> to vector<1x16x32xbf16>
    tpu.vector_store %arg6[%c0_11, %c0_12, %c0_13], %20 {strides = array<i32>} : memref<1x16x32xbf16, #tpu.memory_space<vmem>>, vector<1x16x32xbf16>,
    return
  }
  func.func @transform_0(%arg0: i32, %arg1: i32) -> (i32, i32, i32) {
    %c0_i32 = arith.constant 0 : i32
    %c0_i32_0 = arith.constant 0 : i32
    return %arg0, %arg1, %c0_i32 : i32, i32, i32
  }
  func.func @transform_1(%arg0: i32, %arg1: i32) -> (i32, i32) {
    %c0_i32 = arith.constant 0 : i32
    %c0_i32_0 = arith.constant 0 : i32
    %c0_i32_1 = arith.constant 0 : i32
    return %c0_i32, %c0_i32_0 : i32, i32
  }
  func.func @transform_2(%arg0: i32, %arg1: i32) -> (i32, i32, i32) {
    %c0_i32 = arith.constant 0 : i32
    %c0_i32_0 = arith.constant 0 : i32
    return %arg0, %arg1, %c0_i32 : i32, i32, i32
  }
  func.func @transform_3(%arg0: i32, %arg1: i32) -> (i32, i32, i32) {
    %c0_i32 = arith.constant 0 : i32
    %c0_i32_0 = arith.constant 0 : i32
    return %arg0, %arg1, %c0_i32 : i32, i32, i32
  }
  func.func @transform_4(%arg0: i32, %arg1: i32) -> (i32, i32, i32) {
    %c0_i32 = arith.constant 0 : i32
    %c0_i32_0 = arith.constant 0 : i32
    return %arg0, %arg1, %c0_i32 : i32, i32, i32
  }
}

</mosaic_0001>

<llo_original>
// kernel: tpu_custom_call.1
$region0: #{tpu_custom_call.1}
  #allocation0 [shape = 'u32[]', space=smem, size = 0x4, offset = 0x4, fixed_abs, tag = 'smem constant byte address 0x4 - core index']
  #allocation1 [shape = 'u32[144,128]{1,0:T(1,128)}', space=vmem, size = 0x12000, scoped, tag = 'internal scratch']
  %s0 = inlined_call_operand.hbm [shape: bf16[2,32,32], index: 0, kind: input, shape index: {}]
  %s1 = inlined_call_operand.hbm [shape: bf16[32,96], index: 1, kind: input, shape index: {}]
  %s2 = inlined_call_operand.hbm [shape: bf16[2,32,32], index: 2, kind: output, shape index: {0}]
  %s3 = inlined_call_operand.hbm [shape: bf16[2,32,32], index: 3, kind: output, shape index: {1}]
  %s4 = inlined_call_operand.hbm [shape: bf16[2,32,32], index: 4, kind: output, shape index: {2}]
  %5 = xla_tuple %s2, %s3, %s4
  %s6 = sld [smem:[#allocation0]]
  $region65: #{tpu_custom_call.1} parent=0
    _
  %s8 = ssub.s32 1, %s6
  %s9 = scalar_select 0, %s8, %s6
  $region1: #{tpu_custom_call.1} parent=0
    #allocation2 [shape = 'u8[8192]{0}', space=vmem, size = 0x2000, scoped, tag = 'input window, operand 0']
    #allocation3 [shape = 's32[2]{0}', space=sflag, size = 0x8, scoped, tag = 'scoped memory for tpu_custom_call.1']
    #allocation4 [shape = 's32[2]{0}', space=sflag, size = 0x8, scoped, tag = 'scoped memory for tpu_custom_call.1']
    #allocation5 [shape = 'u8[8192]{0}', space=vmem, size = 0x2000, scoped, tag = 'input window, operand 1, single buffered']
    #allocation6 [shape = 's32[1]{0}', space=sflag, size = 0x4, scoped, tag = 'scoped memory for tpu_custom_call.1']
    #allocation7 [shape = 'u8[8192]{0}', space=vmem, size = 0x2000, scoped, tag = 'output window, operand 0']
    #allocation8 [shape = 'u8[8192]{0}', space=vmem, size = 0x2000, scoped, tag = 'output window, operand 1']
    #allocation9 [shape = 's32[2]{0}', space=sflag, size = 0x8, scoped, tag = 'scoped memory for tpu_custom_call.1']
    #allocation10 [shape = 'u8[8192]{0}', space=vmem, size = 0x2000, scoped, tag = 'output window, operand 2']
    %10 = vsyncpa [#allocation3], 0
    %s11 = scalar_lea.sflag [#allocation3], 1
    %12 = vsyncpa %s11, 0
    %13 = vsyncpa [#allocation6], 0
    %14 = vsyncpa [#allocation4], 0
    %s15 = scalar_lea.sflag [#allocation4], 1
    %16 = vsyncpa %s15, 0
    %17 = vsyncpa [#allocation9], 0
    %s18 = scalar_lea.sflag [#allocation9], 1
    %19 = vsyncpa %s18, 0
    loop: start=0, step=1, limit=6
    $region2: #{tpu_custom_call.1} parent=1 // loop_pre_header
      _
    $region3: #{tpu_custom_call.1} parent=1 // loop_header
      %s21 = sphi 0, %s25
      %p22 = scmp.ge.s32.totalorder %s21, 6
      %s28 = sphi 0, %s40
      %s29 = sphi 0, %s36
      %s30 = sphi 0, %s28
      %s31 = sphi 0, %s29
      %s32 = sphi 0, %s30
      %s33 = sphi 0, %s31
      %s45 = sphi 0, %s47
      %s48 = sphi 0, %s45
      %s49 = sphi 0, %s48
      %s65 = sphi 0, %s49
      %s69 = sphi 0, %s69
      %s71 = sphi 0, %s69
      %s72 = sphi 0, %s71
      %s86 = sphi 0, %s72
      %s94 = sphi 0, %s96
      %s97 = sphi 0, %s94
      %s98 = sphi 0, %s97
      %s114 = sphi 0, %s98
      %s122 = sphi 0, %s124
      %s125 = sphi 0, %s122
      %s126 = sphi 0, %s125
      %s142 = sphi 0, %s126
      %s150 = sphi 0, %s152
      %s153 = sphi 0, %s150
      %s154 = sphi 0, %s153
      %s170 = sphi 0, %s154
    $region4: #{tpu_custom_call.1} parent=1 // loop_header_branch
      %24 = sbr.rel (%p22) target = $region8
    $region5: #{tpu_custom_call.1} parent=1 // loop_body
      %s26 = ssub.s32 %s21, 1
      %s27 = ssub.s32 %s21, 2
      %s34 = sadd.s32 1, %s29
      %p35 = scmp.ge.s32.totalorder %s34, 2
      %s36 = scalar_select %p35, 0, %s34
      %s37 = sadd.s32 1, %s28
      %s38 = scalar_select %p35, %s37, %s28
      %p39 = scmp.ge.s32.totalorder %s38, 2
      %s40 = scalar_select %p39, 0, %s38
      %s41 = ssub.s32 %s28, %s40
      %s42 = ssub.s32 %s29, %s36
      %s43 = sor.u32 %s41, %s42
      %p44 = scmp.eq.s32.totalorder %s43, 0
      %s46 = sadd.s32 %s45, 1
      %s47 = scalar_select %p44, %s45, %s46
      %p50 = pneg %p44
      %p51 = scmp.eq.s32.totalorder %s21, 3
      %p52 = por %p50, %p51
      %p53 = scmp.ne.s32.totalorder %s45, %s48
      %p54 = scmp.eq.s32.totalorder %s21, 0
      %p55 = por %p53, %p54
      %p56 = scmp.ne.s32.totalorder %s45, %s48
      %p57 = scmp.eq.s32.totalorder %s26, 3
      %p58 = por %p56, %p57
      %p59 = scmp.ne.s32.totalorder %s48, %s49
      %p60 = scmp.eq.s32.totalorder %s26, 0
      %p61 = por %p59, %p60
      %p62 = scmp.ne.s32.totalorder %s48, %s49
      %p63 = scmp.eq.s32.totalorder %s27, 3
      %p64 = por %p62, %p63
      %p66 = scmp.ne.s32.totalorder %s49, %s65
      %p67 = scmp.eq.s32.totalorder %s27, 0
      %p68 = por %p66, %p67
      %s70 = sadd.s32 %s69, 1
      %p73 = scmp.eq.s32.totalorder %s21, 3
      %p74 = scmp.ne.s32.totalorder %s69, %s71
      %p75 = scmp.eq.s32.totalorder %s21, 0
      %p76 = por %p74, %p75
      %p77 = scmp.ne.s32.totalorder %s69, %s71
      %p78 = scmp.eq.s32.totalorder %s26, 3
      %p79 = por %p77, %p78
      %p80 = scmp.ne.s32.totalorder %s71, %s72
      %p81 = scmp.eq.s32.totalorder %s26, 0
      %p82 = por %p80, %p81
      %p83 = scmp.ne.s32.totalorder %s71, %s72
      %p84 = scmp.eq.s32.totalorder %s27, 3
      %p85 = por %p83, %p84
      %p87 = scmp.ne.s32.totalorder %s72, %s86
      %p88 = scmp.eq.s32.totalorder %s27, 0
      %p89 = por %p87, %p88
      %s90 = ssub.s32 %s28, %s40
      %s91 = ssub.s32 %s29, %s36
      %s92 = sor.u32 %s90, %s91
      %p93 = scmp.eq.s32.totalorder %s92, 0
      %s95 = sadd.s32 %s94, 1
      %s96 = scalar_select %p93, %s94, %s95
      %p99 = pneg %p93
      %p100 = scmp.eq.s32.totalorder %s21, 3
      %p101 = por %p99, %p100
      %p102 = scmp.ne.s32.totalorder %s94, %s97
      %p103 = scmp.eq.s32.totalorder %s21, 0
      %p104 = por %p102, %p103
      %p105 = scmp.ne.s32.totalorder %s94, %s97
      %p106 = scmp.eq.s32.totalorder %s26, 3
      %p107 = por %p105, %p106
      %p108 = scmp.ne.s32.totalorder %s97, %s98
      %p109 = scmp.eq.s32.totalorder %s26, 0
      %p110 = por %p108, %p109
      %p111 = scmp.ne.s32.totalorder %s97, %s98
      %p112 = scmp.eq.s32.totalorder %s27, 3
      %p113 = por %p111, %p112
      %p115 = scmp.ne.s32.totalorder %s98, %s114
      %p116 = scmp.eq.s32.totalorder %s27, 0
      %p117 = por %p115, %p116
      %s118 = ssub.s32 %s28, %s40
      %s119 = ssub.s32 %s29, %s36
      %s120 = sor.u32 %s118, %s119
      %p121 = scmp.eq.s32.totalorder %s120, 0
      %s123 = sadd.s32 %s122, 1
      %s124 = scalar_select %p121, %s122, %s123
      %p127 = pneg %p121
      %p128 = scmp.eq.s32.totalorder %s21, 3
      %p129 = por %p127, %p128
      %p130 = scmp.ne.s32.totalorder %s122, %s125
      %p131 = scmp.eq.s32.totalorder %s21, 0
      %p132 = por %p130, %p131
      %p133 = scmp.ne.s32.totalorder %s122, %s125
      %p134 = scmp.eq.s32.totalorder %s26, 3
      %p135 = por %p133, %p134
      %p136 = scmp.ne.s32.totalorder %s125, %s126
      %p137 = scmp.eq.s32.totalorder %s26, 0
      %p138 = por %p136, %p137
      %p139 = scmp.ne.s32.totalorder %s125, %s126
      %p140 = scmp.eq.s32.totalorder %s27, 3
      %p141 = por %p139, %p140
      %p143 = scmp.ne.s32.totalorder %s126, %s142
      %p144 = scmp.eq.s32.totalorder %s27, 0
      %p145 = por %p143, %p144
      %s146 = ssub.s32 %s28, %s40
      %s147 = ssub.s32 %s29, %s36
      %s148 = sor.u32 %s146, %s147
      %p149 = scmp.eq.s32.totalorder %s148, 0
      %s151 = sadd.s32 %s150, 1
      %s152 = scalar_select %p149, %s150, %s151
      %p155 = pneg %p149
      %p156 = scmp.eq.s32.totalorder %s21, 3
      %p157 = por %p155, %p156
      %p158 = scmp.ne.s32.totalorder %s150, %s153
      %p159 = scmp.eq.s32.totalorder %s21, 0
      %p160 = por %p158, %p159
      %p161 = scmp.ne.s32.totalorder %s150, %s153
      %p162 = scmp.eq.s32.totalorder %s26, 3
      %p163 = por %p161, %p162
      %p164 = scmp.ne.s32.totalorder %s153, %s154
      %p165 = scmp.eq.s32.totalorder %s26, 0
      %p166 = por %p164, %p165
      %p167 = scmp.ne.s32.totalorder %s153, %s154
      %p168 = scmp.eq.s32.totalorder %s27, 3
      %p169 = por %p167, %p168
      %p171 = scmp.ne.s32.totalorder %s154, %s170
      %p172 = scmp.eq.s32.totalorder %s27, 0
      %p173 = por %p171, %p172
      %p174 = scmp.le.s32.totalorder 1, %s21
      %p175 = scmp.lt.s32.totalorder %s21, 5
      %p176 = pnand %p174, %p175
      %p177 = pneg %p176
      // Predicated region
      $region9: #{tpu_custom_call.1} parent=5 // pred_check
        _
      $region10: #{tpu_custom_call.1} parent=5 // pred_check_branch
        %179 = sbr.rel (%p176) target = $region12
      $region11: #{tpu_custom_call.1} parent=5 // pred_region
        %s180 = ssub.s32 %s21, 1
        // Predicated region
        $region13: #{tpu_custom_call.1} parent=11 // pred_check
          %p181 = pneg %p82
        $region14: #{tpu_custom_call.1} parent=11 // pred_check_branch
          %183 = sbr.rel (%p181) target = $region16
        $region15: #{tpu_custom_call.1} parent=11 // pred_region
          %s185 = ssub.s32 256, 256
          %186 = vsyncadd [#allocation6], %s185
          %s187 = sshll.u32 [#allocation5], 4
          %s188 = int_to_ptr.vmem [resolvable:$true] %s187
          %193 = dma.hbm_to_vmem [thread:$0]  %s1, 256, %s188, [#allocation6], 64, 64, 4
        $region16: #{tpu_custom_call.1} parent=11 // pred_fallthru
          _
      $region12: #{tpu_custom_call.1} parent=5 // pred_fallthru
        _
      %p194 = scmp.lt.s32.totalorder %s21, 4
      // Predicated region
      $region17: #{tpu_custom_call.1} parent=5 // pred_check
        %p195 = pneg %p194
      $region18: #{tpu_custom_call.1} parent=5 // pred_check_branch
        %197 = sbr.rel (%p195) target = $region20
      $region19: #{tpu_custom_call.1} parent=5 // pred_region
        // Predicated region
        $region21: #{tpu_custom_call.1} parent=19 // pred_check
          %p198 = pneg %p55
        $region22: #{tpu_custom_call.1} parent=19 // pred_check_branch
          %200 = sbr.rel (%p198) target = $region24
        $region23: #{tpu_custom_call.1} parent=19 // pred_region
          %s201 = sand.u32 %s45, 1
          %s202 = scalar_lea.sflag [#allocation3], %s201
          %s203 = sand.u32 %s45, 1
          %s204 = smul.addr %s203, 8
          %s205 = scalar_lea.vmem [#allocation2], %s204
          %s206 = smul.u32 2, %s29
          %s208 = ssub.s32 128, 128
          %209 = vsyncadd %s202, %s208
          %s210 = smul.addr %s28, 4
          %s211 = sadd.s32 %s206, %s210
          %s212 = smul.addr %s211, 64
          %s213 = scalar_lea.hbm %s0, %s212
          %s214 = sshll.u32 %s205, 4
          %s215 = int_to_ptr.vmem [resolvable:$true] %s214
          %220 = dma.hbm_to_vmem [thread:$0]  %s213, 128, %s215, %s202, 64, 64, 4
        $region24: #{tpu_custom_call.1} parent=19 // pred_fallthru
          _
      $region20: #{tpu_custom_call.1} parent=5 // pred_fallthru
        _
      %p221 = scmp.le.s32.totalorder 1, %s21
      %p222 = scmp.lt.s32.totalorder %s21, 5
      %p223 = pnand %p221, %p222
      %p224 = pneg %p223
      // Predicated region
      $region25: #{tpu_custom_call.1} parent=5 // pred_check
        _
      $region26: #{tpu_custom_call.1} parent=5 // pred_check_branch
        %226 = sbr.rel (%p223) target = $region28
      $region27: #{tpu_custom_call.1} parent=5 // pred_region
        %s227 = ssub.s32 %s21, 1
        %s228 = sand.u32 %s48, 1
        %s229 = scalar_lea.sflag [#allocation3], %s228
        %s230 = sand.u32 %s48, 1
        %s231 = smul.addr %s230, 8
        %s232 = scalar_lea.vmem [#allocation2], %s231
        // Predicated region
        $region29: #{tpu_custom_call.1} parent=27 // pred_check
          %p233 = pneg %p61
        $region30: #{tpu_custom_call.1} parent=27 // pred_check_branch
          %235 = sbr.rel (%p233) target = $region32
        $region31: #{tpu_custom_call.1} parent=27 // pred_region
          %236 = dma.done %s229, 128
        $region32: #{tpu_custom_call.1} parent=27 // pred_fallthru
          _
        // Predicated region
        $region33: #{tpu_custom_call.1} parent=27 // pred_check
          %p237 = pneg %p82
        $region34: #{tpu_custom_call.1} parent=27 // pred_check_branch
          %239 = sbr.rel (%p237) target = $region36
        $region35: #{tpu_custom_call.1} parent=27 // pred_region
          %240 = dma.done [#allocation6], 256
        $region36: #{tpu_custom_call.1} parent=27 // pred_fallthru
          _
        %s241 = sand.u32 %s48, 1
        %s242 = scalar_lea.sflag [#allocation3], %s241
        %s243 = sand.u32 %s48, 1
        %s244 = smul.addr %s243, 8
        %s245 = scalar_lea.vmem [#allocation2], %s244
        %p246 = pneg %p61
        %p247 = pneg %p58
        %p248 = pneg %p82
        %p249 = pneg %p79
        %p250 = pneg %p110
        %p251 = pneg %p107
        %s252 = sand.u32 %s97, 1
        %s253 = scalar_lea.sflag [#allocation4], %s252
        %s254 = sand.u32 %s97, 1
        %s255 = smul.addr %s254, 8
        %s256 = scalar_lea.vmem [#allocation7], %s255
        %p257 = pneg %p138
        %p258 = pneg %p135
        %s259 = sand.u32 %s26, 1
        %s260 = scalar_lea.sflag [#allocation9], %s259
        %s261 = sand.u32 %s125, 1
        %s262 = smul.addr %s261, 8
        %s263 = scalar_lea.vmem [#allocation8], %s262
        %p264 = pneg %p166
        %p265 = pneg %p163
        %s266 = sand.u32 %s26, 1
        %s267 = scalar_lea.sflag [#allocation9], %s266
        %s268 = sand.u32 %s153, 1
        %s269 = smul.addr %s268, 8
        %s270 = scalar_lea.vmem [#allocation10], %s269
        %s271 = smul.u32 2, %s31
        %s272 = smul.u32 2, %s31
        %s273 = smul.u32 2, %s31
        %s274 = smul.u32 2, %s31
        %v276 = vld [vmem:[%s232] sm:$0xf]
        %v277 = vld [vmem:[%s232 + $0x4] sm:$0xf]
        %v278 = vld [vmem:[#allocation5] sm:$0xf]
        %v279 = vld [vmem:[#allocation5 + $0x4] sm:$0xf]
        %v280 = vld [vmem:[#allocation5 + $0x8] sm:$0xf]
        %v281 = vld [vmem:[#allocation5 + $0xc] sm:$0xf]
        %v284 = vunpack.c.l.b16 %v276
        %v285 = vunpack.c.l.b16 %v277
        %v286 = vpack.c.b16 %v285, %v284
        %v291 = vunpack.c.l.b16 %v278
        %v292 = vunpack.c.l.b16 %v279
        %v293 = vunpack.c.l.b16 %v280
        %v294 = vunpack.c.l.b16 %v281
        %v295 = vpack.c.b16 %v292, %v291
        %v296 = vpack.c.b16 %v294, %v293
        %vm299 = vcmask 261120
        %v301 = vsel %vm299, %v286, 0
        %303 = vmatprep.subr.bf16.mxu0 0
        %304 = vmatpush1.bf16.msra.mxu0 %v295
        %305 = vmatprep.subr.bf16.mxu0 0
        %306 = vmatpush1.bf16.msra.mxu0 %v296
        %307 = vmatprep.subr.bf16.mxu0 0
        %308 = vmatpush1.bf16.msra.mxu0 0
        %309 = vmatprep.subr.bf16.mxu0 0
        %310 = vmatpush1.bf16.msra.mxu0 0
        %311 = vmatprep.subr.bf16.mxu0 0
        %312 = vmatpush1.bf16.msra.mxu0 0
        %313 = vmatprep.subr.bf16.mxu0 0
        %314 = vmatpush1.bf16.msra.mxu0 0
        %315 = vmatprep.subr.bf16.mxu0 0
        %316 = vmatpush1.bf16.msra.mxu0 0
        %317 = vmatprep.subr.bf16.mxu0 0
        %318 = vmatpush1.bf16.msra.mxu0 0
        %319 = vmatprep.subr.bf16.mxu0 0
        %320 = vmatpush1.bf16.msra.mxu0 0
        %321 = vmatprep.subr.bf16.mxu0 0
        %322 = vmatpush1.bf16.msra.mxu0 0
        %323 = vmatprep.subr.bf16.mxu0 0
        %324 = vmatpush1.bf16.msra.mxu0 0
        %325 = vmatprep.subr.bf16.mxu0 0
        %326 = vmatpush1.bf16.msra.mxu0 0
        %327 = vmatprep.subr.bf16.mxu0 0
        %328 = vmatpush1.bf16.msra.mxu0 0
        %329 = vmatprep.subr.bf16.mxu0 0
        %330 = vmatpush1.bf16.msra.mxu0 0
        %331 = vmatprep.subr.bf16.mxu0 0
        %332 = vmatpush1.bf16.msra.mxu0 0
        %333 = vmatprep.subr.bf16.mxu0 0
        %334 = vmatpush1.bf16.msra.mxu0 0
        %335 = vmatprep.mubr.bf16.mxu0 0
        %336 = vmatmul.mubr.bf16.gmra.mrb[0].mxu0 %v301
        %v337 = vpop.f32.mrb[0].mxu0
        %v338 = vadd.f32 0.0, %v337
        %v339 = vpop.f32.mrb[0].mxu0
        %v340 = vpop.f32.mrb[0].mxu0
        %v341 = vadd.f32 0.0, %v340
        %v342 = vpop.f32.mrb[0].mxu0
        %343 = vdwg.mxu0
        %v344 = vmul.f32 %v338, 0.35355338
        %v345 = vmul.f32 %v341, 0.35355338
        %v346 = vpack.c.bf16 %v345, %v344
        %v348 = vunpack.c.l.b16 %v346
        %v349 = vunpack.c.h.b16 %v346
        %v350 = vpack.c.b16 %v348, %v348
        %v351 = vpack.c.b16 %v349, %v349
        %vm354 = vcmask 257024
        %355 = vst.msk [vmem:[%s256] sm:$0xf] %vm354, %v350
        %356 = vst.msk [vmem:[%s256 + $0x4] sm:$0xf] %vm354, %v351
        %v357 = vpack.c.bf16 %v341, %v338
        %v359 = vunpack.c.l.b16 %v357
        %v360 = vunpack.c.h.b16 %v357
        %v361 = vpack.c.b16 %v359, %v359
        %v362 = vpack.c.b16 %v360, %v360
        %363 = vrot.lane.b32.xlu0 %v361, 96
        %v364 = vpop.permute.xlu0 %363
        %365 = vrot.lane.b32.xlu0 %v362, 96
        %v366 = vpop.permute.xlu0 %365
        %369 = vst.msk [vmem:[%s263] sm:$0xf] %vm354, %v364
        %370 = vst.msk [vmem:[%s263 + $0x4] sm:$0xf] %vm354, %v366
        %371 = vrot.lane.b32.xlu0 %v361, 64
        %v372 = vpop.permute.xlu0 %371
        %373 = vrot.lane.b32.xlu0 %v362, 64
        %v374 = vpop.permute.xlu0 %373
        %377 = vst.msk [vmem:[%s270] sm:$0xf] %vm354, %v372
        %378 = vst.msk [vmem:[%s270 + $0x4] sm:$0xf] %vm354, %v374
        %s379 = sand.u32 %s97, 1
        %s380 = scalar_lea.sflag [#allocation4], %s379
        %s381 = sand.u32 %s97, 1
        %s382 = smul.addr %s381, 8
        %s383 = scalar_lea.vmem [#allocation7], %s382
        %s384 = sand.u32 %s26, 1
        %s385 = scalar_lea.sflag [#allocation9], %s384
        %s386 = sand.u32 %s125, 1
        %s387 = smul.addr %s386, 8
        %s388 = scalar_lea.vmem [#allocation8], %s387
        %s389 = sand.u32 %s26, 1
        %s390 = scalar_lea.sflag [#allocation9], %s389
        %s391 = sand.u32 %s153, 1
        %s392 = smul.addr %s391, 8
        %s393 = scalar_lea.vmem [#allocation10], %s392
        // Predicated region
        $region37: #{tpu_custom_call.1} parent=27 // pred_check
          %p394 = pneg %p107
        $region38: #{tpu_custom_call.1} parent=27 // pred_check_branch
          %396 = sbr.rel (%p394) target = $region40
        $region39: #{tpu_custom_call.1} parent=27 // pred_region
          %s397 = smul.u32 2, %s31
          %s399 = ssub.s32 128, 128
          %400 = vsyncadd %s380, %s399
          %s401 = smul.addr %s30, 4
          %s402 = sadd.s32 %s397, %s401
          %s403 = smul.addr %s402, 64
          %s404 = scalar_lea.hbm %s2, %s403
          %s405 = sshll.u32 %s383, 4
          %s406 = int_to_ptr.vmem [resolvable:$true] %s405
          %411 = dma.vmem_to_hbm [thread:$0]  %s406, 128, %s404, %s380, 64, 64, 4
        $region40: #{tpu_custom_call.1} parent=27 // pred_fallthru
          _
        // Predicated region
        $region41: #{tpu_custom_call.1} parent=27 // pred_check
          %p412 = pneg %p135
        $region42: #{tpu_custom_call.1} parent=27 // pred_check_branch
          %414 = sbr.rel (%p412) target = $region44
        $region43: #{tpu_custom_call.1} parent=27 // pred_region
          %s415 = smul.u32 2, %s31
          %s417 = ssub.s32 128, 128
          %418 = vsyncadd %s385, %s417
          %s419 = smul.addr %s30, 4
          %s420 = sadd.s32 %s415, %s419
          %s421 = smul.addr %s420, 64
          %s422 = scalar_lea.hbm %s3, %s421
          %s423 = sshll.u32 %s388, 4
          %s424 = int_to_ptr.vmem [resolvable:$true] %s423
          %429 = dma.vmem_to_hbm [thread:$0]  %s424, 128, %s422, %s385, 64, 64, 4
        $region44: #{tpu_custom_call.1} parent=27 // pred_fallthru
          _
        // Predicated region
        $region45: #{tpu_custom_call.1} parent=27 // pred_check
          %p430 = pneg %p163
        $region46: #{tpu_custom_call.1} parent=27 // pred_check_branch
          %432 = sbr.rel (%p430) target = $region48
        $region47: #{tpu_custom_call.1} parent=27 // pred_region
          %s433 = smul.u32 2, %s31
          %s435 = ssub.s32 128, 128
          %436 = vsyncadd %s390, %s435
          %s437 = smul.addr %s30, 4
          %s438 = sadd.s32 %s433, %s437
          %s439 = smul.addr %s438, 64
          %s440 = scalar_lea.hbm %s4, %s439
          %s441 = sshll.u32 %s393, 4
          %s442 = int_to_ptr.vmem [resolvable:$true] %s441
          %447 = dma.vmem_to_hbm [thread:$0]  %s442, 128, %s440, %s390, 64, 64, 4
        $region48: #{tpu_custom_call.1} parent=27 // pred_fallthru
          _
      $region28: #{tpu_custom_call.1} parent=5 // pred_fallthru
        _
      %p448 = scmp.le.s32.totalorder 2, %s21
      // Predicated region
      $region49: #{tpu_custom_call.1} parent=5 // pred_check
        %p449 = pneg %p448
      $region50: #{tpu_custom_call.1} parent=5 // pred_check_branch
        %451 = sbr.rel (%p449) target = $region52
      $region51: #{tpu_custom_call.1} parent=5 // pred_region
        %s452 = ssub.s32 %s21, 2
        // Predicated region
        $region53: #{tpu_custom_call.1} parent=51 // pred_check
          %p453 = pneg %p113
        $region54: #{tpu_custom_call.1} parent=51 // pred_check_branch
          %455 = sbr.rel (%p453) target = $region56
        $region55: #{tpu_custom_call.1} parent=51 // pred_region
          %s456 = sand.u32 %s98, 1
          %s457 = scalar_lea.sflag [#allocation4], %s456
          %s458 = sand.u32 %s98, 1
          %s459 = smul.addr %s458, 8
          %s460 = scalar_lea.vmem [#allocation7], %s459
          %461 = dma.done %s457, 128
        $region56: #{tpu_custom_call.1} parent=51 // pred_fallthru
          _
        // Predicated region
        $region57: #{tpu_custom_call.1} parent=51 // pred_check
          %p462 = pneg %p141
        $region58: #{tpu_custom_call.1} parent=51 // pred_check_branch
          %464 = sbr.rel (%p462) target = $region60
        $region59: #{tpu_custom_call.1} parent=51 // pred_region
          %s465 = sand.u32 %s27, 1
          %s466 = scalar_lea.sflag [#allocation9], %s465
          %s467 = sand.u32 %s126, 1
          %s468 = smul.addr %s467, 8
          %s469 = scalar_lea.vmem [#allocation8], %s468
          %470 = dma.done %s466, 128
        $region60: #{tpu_custom_call.1} parent=51 // pred_fallthru
          _
        // Predicated region
        $region61: #{tpu_custom_call.1} parent=51 // pred_check
          %p471 = pneg %p169
        $region62: #{tpu_custom_call.1} parent=51 // pred_check_branch
          %473 = sbr.rel (%p471) target = $region64
        $region63: #{tpu_custom_call.1} parent=51 // pred_region
          %s474 = sand.u32 %s27, 1
          %s475 = scalar_lea.sflag [#allocation9], %s474
          %s476 = sand.u32 %s154, 1
          %s477 = smul.addr %s476, 8
          %s478 = scalar_lea.vmem [#allocation10], %s477
          %479 = dma.done %s475, 128
        $region64: #{tpu_custom_call.1} parent=51 // pred_fallthru
          _
      $region52: #{tpu_custom_call.1} parent=5 // pred_fallthru
        _
    $region6: #{tpu_custom_call.1} parent=1 // loop_footer
      %s25 = sadd.s32 1, %s21
    $region7: #{tpu_custom_call.1} parent=1 // loop_footer_branch
      %20 = sbr.rel target = $region3
    $region8: #{tpu_custom_call.1} parent=1 // loop_exit
      _
    %480 = vsyncpa [#allocation3], 1
    %s481 = scalar_lea.sflag [#allocation3], 1
    %482 = vsyncpa %s481, 1
    %483 = vsyncpa [#allocation6], 1
    %484 = vsyncpa [#allocation4], 1
    %s485 = scalar_lea.sflag [#allocation4], 1
    %486 = vsyncpa %s485, 1
    %487 = vsyncpa [#allocation9], 1
    %s488 = scalar_lea.sflag [#allocation9], 1
    %489 = vsyncpa %s488, 1

</llo_original>
